<compile_context>
chip_gen: v5e
topology: v5e:2x2
jax: 0.10.0
libtpu: 0.0.40
codegen_flags: <defaults>
</compile_context>

<pallas_src>
import functools

import numpy as np
import jax
import jax.numpy as jnp
from jax.experimental import pallas as pl
from jax.experimental.pallas import tpu as pltpu

_EPS = 1e-5
_NEG_SLOPE = 0.1
_DROP_P = 0.5
# keep with prob (1 - p): compare the low 31 hash bits against this threshold
_KEEP_THRESH = int((1.0 - _DROP_P) * 2147483648.0)


def _leaky(x):
    return jnp.where(x >= 0.0, x, _NEG_SLOPE * x)


def _bn_scale_shift(t, gamma, beta, count):
    """Training-mode BatchNorm folded into per-channel scale/shift (a, c).

    `t` is (C, Wp) with exact zeros in the lane-pad columns, so summing over the
    full padded width and dividing by the true element count gives exact stats.
    """
    s1 = jnp.sum(t, axis=1, keepdims=True)
    s2 = jnp.sum(t * t, axis=1, keepdims=True)
    mean = s1 * (1.0 / count)
    var = jnp.maximum(s2 * (1.0 / count) - mean * mean, 0.0)
    a = gamma * jax.lax.rsqrt(var + _EPS)
    return a, beta - mean * a


def _block_body(seed_ref, mask_ref, x1_ref, w1_ref, g1_ref, b1_ref,
                w2_ref, g2_ref, b2_ref, shortcut, o_ref, *, Cin, count):
    Cout, Wp = o_ref.shape

    m = mask_ref[...]                       # (3, Wp), static 0/1 masks
    valid = m[0:1, :]                       # lane is a real (n, l) position
    left_ok = m[1:2, :]                     # valid and l != 0
    right_ok = m[2:3, :]                    # valid and l != L_out - 1

    x1 = x1_ref[...]                        # (3*Cin, Wp) conv1 im2col slab

    # ---- conv1: one fused (Cout, 3*Cin) x (3*Cin, Wp) contraction -------------
    h = jnp.dot(w1_ref[...], x1, preferred_element_type=jnp.float32)

    # ---- BN1 (batch stats) fused into scale/shift, then leaky_relu(0.1) -------
    a1, c1 = _bn_scale_shift(h, g1_ref[...], b1_ref[...], count)
    h = _leaky(h * a1 + c1)

    # ---- dropout(p=0.5): one counter-hash draw + integer threshold compare ----
    seed = seed_ref[0].astype(jnp.uint32)
    idx = (jax.lax.broadcasted_iota(jnp.int32, (Cout, Wp), 0) * Wp
           + jax.lax.broadcasted_iota(jnp.int32, (Cout, Wp), 1)).astype(jnp.uint32)
    z = idx * jnp.uint32(0x9E3779B9) + seed
    z = z ^ (z >> 16)
    z = z * jnp.uint32(0x7FEB352D)
    z = z ^ (z >> 15)
    z = z * jnp.uint32(0x846CA68B)
    z = z ^ (z >> 16)
    keep = ((z & jnp.uint32(0x7FFFFFFF)) < jnp.uint32(_KEEP_THRESH)).astype(jnp.float32)
    # Fold the lane-validity mask in: zeroes the pad tail so every downstream
    # batch-stat sum over the full padded width stays exact.
    h = h * (keep * jnp.float32(1.0 / (1.0 - _DROP_P))) * valid

    # ---- conv2 (k=3, s=1, p=1): two shifted copies + per-sample boundary masks,
    #      then one fused (Cout, 3*Cout) x (3*Cout, Wp) contraction ------------
    zc = jnp.zeros((Cout, 1), jnp.float32)
    h_prev = jnp.concatenate([zc, h[:, :Wp - 1]], axis=1) * left_ok
    h_next = jnp.concatenate([h[:, 1:], zc], axis=1) * right_ok
    h3 = jnp.concatenate([h_prev, h, h_next], axis=0)        # (3*Cout, Wp)
    y = jnp.dot(w2_ref[...], h3, preferred_element_type=jnp.float32)

    # ---- BN2 ------------------------------------------------------------------
    a2, c2 = _bn_scale_shift(y, g2_ref[...], b2_ref[...], count)
    y = y * a2 + c2

    # ---- shortcut -------------------------------------------------------------
    if shortcut is None:
        # stride == 1: identity shortcut == centre tap of the conv1 patch slab.
        sc = x1[Cin:2 * Cin, :]
    else:
        xs_ref, ws_ref, gs_ref, bs_ref = shortcut
        sc = jnp.dot(ws_ref[...], xs_ref[...], preferred_element_type=jnp.float32)
        a_s, c_s = _bn_scale_shift(sc, gs_ref[...], bs_ref[...], count)
        sc = sc * a_s + c_s

    # ---- residual add + final leaky_relu: one unmasked full-lane store --------
    o_ref[...] = _leaky(y + sc)


def _kernel_identity(seed_ref, mask_ref, x1_ref, w1_ref, g1_ref, b1_ref,
                     w2_ref, g2_ref, b2_ref, o_ref, *, Cin, count):
    _block_body(seed_ref, mask_ref, x1_ref, w1_ref, g1_ref, b1_ref,
                w2_ref, g2_ref, b2_ref, None, o_ref, Cin=Cin, count=count)


def _kernel_projection(seed_ref, mask_ref, x1_ref, w1_ref, g1_ref, b1_ref,
                       w2_ref, g2_ref, b2_ref, xs_ref, ws_ref, gs_ref, bs_ref,
                       o_ref, *, Cin, count):
    _block_body(seed_ref, mask_ref, x1_ref, w1_ref, g1_ref, b1_ref,
                w2_ref, g2_ref, b2_ref, (xs_ref, ws_ref, gs_ref, bs_ref),
                o_ref, Cin=Cin, count=count)


def init_params(key, in_planes, stride):
    """Deterministic synthetic parameters matching the module's __init__ shapes."""
    planes = in_planes * stride
    k1, k2, k3 = jax.random.split(key, 3)
    p = {
        "w1": jax.random.normal(k1, (planes, in_planes, 3), jnp.float32)
              / jnp.sqrt(3.0 * in_planes),
        "g1": jnp.ones((planes,), jnp.float32),
        "b1": jnp.zeros((planes,), jnp.float32),
        "w2": jax.random.normal(k2, (planes, planes, 3), jnp.float32)
              / jnp.sqrt(3.0 * planes),
        "g2": jnp.ones((planes,), jnp.float32),
        "b2": jnp.zeros((planes,), jnp.float32),
    }
    if stride != 1:
        p["ws"] = jax.random.normal(k3, (planes, in_planes, 1), jnp.float32) \
                  / jnp.sqrt(float(in_planes))
        p["gs"] = jnp.ones((planes,), jnp.float32)
        p["bs"] = jnp.zeros((planes,), jnp.float32)
    return p


def basic_block_enc(x, params, *, stride=1, seed=0):
    """Pallas forward of BasicBlockEnc.  x: (N, Cin, L) float32 (NCL layout)."""
    x = x.astype(jnp.float32)
    N, Cin, L = x.shape
    Cout = Cin * stride
    L_out = (L - 1) // stride + 1
    W = N * L_out                              # folded (batch, length) lane axis
    Wp = ((W + 127) // 128) * 128              # lane-pad to a multiple of 128

    # ---- glue: conv1 im2col (3 taps, already strided), folded + lane-padded ----
    x_pad = jnp.pad(x, ((0, 0), (0, 0), (1, 1)))
    taps = [x_pad[:, :, k: k + (L_out - 1) * stride + 1: stride] for k in range(3)]
    x1 = jnp.stack(taps, axis=0)                               # (3, N, Cin, L_out)
    x1 = jnp.transpose(x1, (0, 2, 1, 3)).reshape(3 * Cin, W)   # rows = k*Cin + c
    x1 = jnp.pad(x1, ((0, 0), (0, Wp - W)))

    # ---- glue: fused weights / BN params ---------------------------------------
    w1 = jnp.transpose(params["w1"].astype(jnp.float32), (0, 2, 1)).reshape(Cout, 3 * Cin)
    w2 = jnp.transpose(params["w2"].astype(jnp.float32), (0, 2, 1)).reshape(Cout, 3 * Cout)
    col = lambda v: v.reshape(-1, 1).astype(jnp.float32)
    g1, b1 = col(params["g1"]), col(params["b1"])
    g2, b2 = col(params["g2"]), col(params["b2"])

    # ---- static lane masks (built with numpy at trace time, passed as one input)
    j = np.arange(Wp)
    pos = j % L_out
    valid = j < W
    masks = np.stack([valid,
                      valid & (pos != 0),
                      valid & (pos != L_out - 1)]).astype(np.float32)   # (3, Wp)

    seed_arr = jnp.array([seed], dtype=jnp.int32)
    count = float(N * L_out)

    vmem = pl.BlockSpec(memory_space=pltpu.MemorySpace.VMEM)
    smem = pl.BlockSpec(memory_space=pltpu.MemorySpace.SMEM)

    if stride == 1:
        kernel = functools.partial(_kernel_identity, Cin=Cin, count=count)
        args = (seed_arr, jnp.asarray(masks), x1, w1, g1, b1, w2, g2, b2)
        in_specs = [smem] + [vmem] * 8
    else:
        xs = x[:, :, ::stride]                                  # (N, Cin, L_out)
        xs = jnp.transpose(xs, (1, 0, 2)).reshape(Cin, W)
        xs = jnp.pad(xs, ((0, 0), (0, Wp - W)))
        ws = params["ws"][:, :, 0].astype(jnp.float32)          # (Cout, Cin)
        gs, bs = col(params["gs"]), col(params["bs"])
        kernel = functools.partial(_kernel_projection, Cin=Cin, count=count)
        args = (seed_arr, jnp.asarray(masks), x1, w1, g1, b1, w2, g2, b2,
                xs, ws, gs, bs)
        in_specs = [smem] + [vmem] * 12

    out = pl.pallas_call(
        kernel,
        out_shape=jax.ShapeDtypeStruct((Cout, Wp), jnp.float32),
        in_specs=in_specs,
        out_specs=vmem,
    )(*args)

    # ---- glue: crop the lane pad and unfold back to (N, Cout, L_out) -----------
    return jnp.transpose(out[:, :W].reshape(Cout, N, L_out), (1, 0, 2))


if __name__ == "__main__":
    key = jax.random.PRNGKey(0)
    kx, kp1, kp2 = jax.random.split(key, 3)

    # Small shapes consistent with the module: batch=2, in_planes=4, length=16.
    x = jax.random.normal(kx, (2, 4, 16), dtype=jnp.float32)

    for stride, kp in ((1, kp1), (2, kp2)):
        params = init_params(kp, in_planes=4, stride=stride)
        out = basic_block_enc(x, params, stride=stride, seed=0)
        out = jax.block_until_ready(out)
        N, C, L = x.shape
        assert out.shape == (N, C * stride, (L - 1) // stride + 1), out.shape
        assert bool(jnp.all(jnp.isfinite(out)))

    print("KERNEL_OK")
</pallas_src>

<mosaic_0001>
module attributes {stable_mosaic.version = 11 : i64} {
  func.func @_kernel_identity(%arg0: memref<1xi32, #tpu.memory_space<smem>>, %arg1: memref<3x128xf32, #tpu.memory_space<vmem>>, %arg2: memref<12x128xf32, #tpu.memory_space<vmem>>, %arg3: memref<4x12xf32, #tpu.memory_space<vmem>>, %arg4: memref<4x1xf32, #tpu.memory_space<vmem>>, %arg5: memref<4x1xf32, #tpu.memory_space<vmem>>, %arg6: memref<4x12xf32, #tpu.memory_space<vmem>>, %arg7: memref<4x1xf32, #tpu.memory_space<vmem>>, %arg8: memref<4x1xf32, #tpu.memory_space<vmem>>, %arg9: memref<4x128xf32, #tpu.memory_space<vmem>>) attributes {dimension_semantics = [], scalar_prefetch = 0 : i64, scratch_operands = 0 : i64, tpu.core_type = #tpu.core_type<tc>} {
    %c0 = arith.constant 0 : index
    %c0_0 = arith.constant 0 : index
    %0 = vector.load %arg1[%c0, %c0_0] : memref<3x128xf32, #tpu.memory_space<vmem>>, vector<3x128xf32>
    %1 = vector.extract_strided_slice %0 {offsets = [0, 0], sizes = [1, 128], strides = [1, 1]} : vector<3x128xf32> to vector<1x128xf32>
    %2 = vector.extract_strided_slice %0 {offsets = [1, 0], sizes = [1, 128], strides = [1, 1]} : vector<3x128xf32> to vector<1x128xf32>
    %3 = vector.extract_strided_slice %0 {offsets = [2, 0], sizes = [1, 128], strides = [1, 1]} : vector<3x128xf32> to vector<1x128xf32>
    %c0_1 = arith.constant 0 : index
    %c0_2 = arith.constant 0 : index
    %4 = vector.load %arg2[%c0_1, %c0_2] : memref<12x128xf32, #tpu.memory_space<vmem>>, vector<12x128xf32>
    %c0_3 = arith.constant 0 : index
    %c0_4 = arith.constant 0 : index
    %5 = vector.load %arg3[%c0_3, %c0_4] : memref<4x12xf32, #tpu.memory_space<vmem>>, vector<4x12xf32>
    %cst = arith.constant dense<0.000000e+00> : vector<4x128xf32>
    %6 = tpu.matmul %5, %4, %cst {dimension_numbers = #tpu.dot_dimension_numbers<[1], [0], [0], [1], [0, 0, 1, 1], [], []>} : vector<4x12xf32>, vector<12x128xf32>, vector<4x128xf32> -> vector<4x128xf32>
    %c0_5 = arith.constant 0 : index
    %c0_6 = arith.constant 0 : index
    %7 = vector.load %arg4[%c0_5, %c0_6] : memref<4x1xf32, #tpu.memory_space<vmem>>, vector<4x1xf32>
    %c0_7 = arith.constant 0 : index
    %c0_8 = arith.constant 0 : index
    %8 = vector.load %arg5[%c0_7, %c0_8] : memref<4x1xf32, #tpu.memory_space<vmem>>, vector<4x1xf32>
    %cst_9 = arith.constant dense<0.000000e+00> : vector<4xf32>
    %9 = vector.multi_reduction <add>, %6, %cst_9 [1] : vector<4x128xf32> to vector<4xf32>
    %10 = vector.shape_cast %9 : vector<4xf32> to vector<4x1xf32>
    %11 = arith.mulf %6, %6 : vector<4x128xf32>
    %cst_10 = arith.constant dense<0.000000e+00> : vector<4xf32>
    %12 = vector.multi_reduction <add>, %11, %cst_10 [1] : vector<4x128xf32> to vector<4xf32>
    %13 = vector.shape_cast %12 : vector<4xf32> to vector<4x1xf32>
    %cst_11 = arith.constant 3.125000e-02 : f32
    %14 = vector.broadcast %cst_11 : f32 to vector<4x1xf32>
    %15 = arith.mulf %10, %14 : vector<4x1xf32>
    %cst_12 = arith.constant 3.125000e-02 : f32
    %16 = vector.broadcast %cst_12 : f32 to vector<4x1xf32>
    %17 = arith.mulf %13, %16 : vector<4x1xf32>
    %18 = arith.mulf %15, %15 : vector<4x1xf32>
    %19 = arith.subf %17, %18 : vector<4x1xf32>
    %cst_13 = arith.constant 0.000000e+00 : f32
    %20 = vector.broadcast %cst_13 : f32 to vector<4x1xf32>
    %21 = arith.maximumf %19, %20 : vector<4x1xf32>
    %cst_14 = arith.constant 9.99999974E-6 : f32
    %22 = vector.broadcast %cst_14 : f32 to vector<4x1xf32>
    %23 = arith.addf %21, %22 : vector<4x1xf32>
    %24 = math.rsqrt %23 : vector<4x1xf32>
    %25 = arith.mulf %7, %24 : vector<4x1xf32>
    %26 = arith.mulf %15, %25 : vector<4x1xf32>
    %27 = arith.subf %8, %26 : vector<4x1xf32>
    %28 = vector.broadcast %25 : vector<4x1xf32> to vector<4x128xf32>
    %29 = arith.mulf %6, %28 : vector<4x128xf32>
    %30 = vector.broadcast %27 : vector<4x1xf32> to vector<4x128xf32>
    %31 = arith.addf %29, %30 : vector<4x128xf32>
    %cst_15 = arith.constant 0.000000e+00 : f32
    %32 = vector.broadcast %cst_15 : f32 to vector<4x128xf32>
    %33 = arith.cmpf oge, %31, %32 : vector<4x128xf32>
    %cst_16 = arith.constant 1.000000e-01 : f32
    %34 = vector.broadcast %cst_16 : f32 to vector<4x128xf32>
    %35 = arith.mulf %34, %31 : vector<4x128xf32>
    %36 = arith.select %33, %31, %35 : vector<4x128xi1>, vector<4x128xf32>
    %c0_17 = arith.constant 0 : index
    %37 = memref.load %arg0[%c0_17] : memref<1xi32, #tpu.memory_space<smem>>
    %38 = tpu.iota {dimensions = array<i32: 0>} : vector<4x128xi32>
    %c128_i32 = arith.constant 128 : i32
    %39 = vector.broadcast %c128_i32 : i32 to vector<4x128xi32>
    %40 = arith.muli %38, %39 : vector<4x128xi32>
    %41 = tpu.iota {dimensions = array<i32: 1>} : vector<4x128xi32>
    %42 = arith.addi %40, %41 : vector<4x128xi32>
    %c-1640531527_i32 = arith.constant -1640531527 : i32
    %43 = vector.broadcast %c-1640531527_i32 : i32 to vector<4x128xi32>
    %44 = arith.muli %42, %43 : vector<4x128xi32>
    %45 = vector.broadcast %37 : i32 to vector<4x128xi32>
    %46 = arith.addi %44, %45 : vector<4x128xi32>
    %c16_i32 = arith.constant 16 : i32
    %47 = vector.broadcast %c16_i32 : i32 to vector<4x128xi32>
    %48 = arith.shrui %46, %47 : vector<4x128xi32>
    %49 = arith.xori %46, %48 : vector<4x128xi32>
    %c2146121005_i32 = arith.constant 2146121005 : i32
    %50 = vector.broadcast %c2146121005_i32 : i32 to vector<4x128xi32>
    %51 = arith.muli %49, %50 : vector<4x128xi32>
    %c15_i32 = arith.constant 15 : i32
    %52 = vector.broadcast %c15_i32 : i32 to vector<4x128xi32>
    %53 = arith.shrui %51, %52 : vector<4x128xi32>
    %54 = arith.xori %51, %53 : vector<4x128xi32>
    %c-2073254261_i32 = arith.constant -2073254261 : i32
    %55 = vector.broadcast %c-2073254261_i32 : i32 to vector<4x128xi32>
    %56 = arith.muli %54, %55 : vector<4x128xi32>
    %c16_i32_18 = arith.constant 16 : i32
    %57 = vector.broadcast %c16_i32_18 : i32 to vector<4x128xi32>
    %58 = arith.shrui %56, %57 : vector<4x128xi32>
    %59 = arith.xori %56, %58 : vector<4x128xi32>
    %c2147483647_i32 = arith.constant 2147483647 : i32
    %60 = vector.broadcast %c2147483647_i32 : i32 to vector<4x128xi32>
    %61 = arith.andi %59, %60 : vector<4x128xi32>
    %c1073741824_i32 = arith.constant 1073741824 : i32
    %62 = vector.broadcast %c1073741824_i32 : i32 to vector<4x128xi32>
    %63 = arith.cmpi ult, %61, %62 : vector<4x128xi32>
    %64 = arith.extui %63 : vector<4x128xi1> to vector<4x128xi32>
    %65 = arith.sitofp %64 : vector<4x128xi32> to vector<4x128xf32>
    %cst_19 = arith.constant 2.000000e+00 : f32
    %66 = vector.broadcast %cst_19 : f32 to vector<4x128xf32>
    %67 = arith.mulf %65, %66 : vector<4x128xf32>
    %68 = arith.mulf %36, %67 : vector<4x128xf32>
    %69 = vector.broadcast %1 : vector<1x128xf32> to vector<4x128xf32>
    %70 = arith.mulf %68, %69 : vector<4x128xf32>
    %cst_20 = arith.constant 0.000000e+00 : f32
    %71 = vector.broadcast %cst_20 : f32 to vector<4x1xf32>
    %72 = vector.extract_strided_slice %70 {offsets = [0, 0], sizes = [4, 127], strides = [1, 1]} : vector<4x128xf32> to vector<4x127xf32>
    %73 = tpu.concatenate %71, %72 in 1 : vector<4x1xf32>, vector<4x127xf32> -> vector<4x128xf32>
    %74 = vector.broadcast %2 : vector<1x128xf32> to vector<4x128xf32>
    %75 = arith.mulf %73, %74 : vector<4x128xf32>
    %76 = vector.extract_strided_slice %70 {offsets = [0, 1], sizes = [4, 127], strides = [1, 1]} : vector<4x128xf32> to vector<4x127xf32>
    %77 = tpu.concatenate %76, %71 in 1 : vector<4x127xf32>, vector<4x1xf32> -> vector<4x128xf32>
    %78 = vector.broadcast %3 : vector<1x128xf32> to vector<4x128xf32>
    %79 = arith.mulf %77, %78 : vector<4x128xf32>
    %80 = tpu.concatenate %75, %70, %79 in 0 : vector<4x128xf32>, vector<4x128xf32>, vector<4x128xf32> -> vector<12x128xf32>
    %c0_21 = arith.constant 0 : index
    %c0_22 = arith.constant 0 : index
    %81 = vector.load %arg6[%c0_21, %c0_22] : memref<4x12xf32, #tpu.memory_space<vmem>>, vector<4x12xf32>
    %cst_23 = arith.constant dense<0.000000e+00> : vector<4x128xf32>
    %82 = tpu.matmul %81, %80, %cst_23 {dimension_numbers = #tpu.dot_dimension_numbers<[1], [0], [0], [1], [0, 0, 1, 1], [], []>} : vector<4x12xf32>, vector<12x128xf32>, vector<4x128xf32> -> vector<4x128xf32>
    %c0_24 = arith.constant 0 : index
    %c0_25 = arith.constant 0 : index
    %83 = vector.load %arg7[%c0_24, %c0_25] : memref<4x1xf32, #tpu.memory_space<vmem>>, vector<4x1xf32>
    %c0_26 = arith.constant 0 : index
    %c0_27 = arith.constant 0 : index
    %84 = vector.load %arg8[%c0_26, %c0_27] : memref<4x1xf32, #tpu.memory_space<vmem>>, vector<4x1xf32>
    %cst_28 = arith.constant dense<0.000000e+00> : vector<4xf32>
    %85 = vector.multi_reduction <add>, %82, %cst_28 [1] : vector<4x128xf32> to vector<4xf32>
    %86 = vector.shape_cast %85 : vector<4xf32> to vector<4x1xf32>
    %87 = arith.mulf %82, %82 : vector<4x128xf32>
    %cst_29 = arith.constant dense<0.000000e+00> : vector<4xf32>
    %88 = vector.multi_reduction <add>, %87, %cst_29 [1] : vector<4x128xf32> to vector<4xf32>
    %89 = vector.shape_cast %88 : vector<4xf32> to vector<4x1xf32>
    %cst_30 = arith.constant 3.125000e-02 : f32
    %90 = vector.broadcast %cst_30 : f32 to vector<4x1xf32>
    %91 = arith.mulf %86, %90 : vector<4x1xf32>
    %cst_31 = arith.constant 3.125000e-02 : f32
    %92 = vector.broadcast %cst_31 : f32 to vector<4x1xf32>
    %93 = arith.mulf %89, %92 : vector<4x1xf32>
    %94 = arith.mulf %91, %91 : vector<4x1xf32>
    %95 = arith.subf %93, %94 : vector<4x1xf32>
    %cst_32 = arith.constant 0.000000e+00 : f32
    %96 = vector.broadcast %cst_32 : f32 to vector<4x1xf32>
    %97 = arith.maximumf %95, %96 : vector<4x1xf32>
    %cst_33 = arith.constant 9.99999974E-6 : f32
    %98 = vector.broadcast %cst_33 : f32 to vector<4x1xf32>
    %99 = arith.addf %97, %98 : vector<4x1xf32>
    %100 = math.rsqrt %99 : vector<4x1xf32>
    %101 = arith.mulf %83, %100 : vector<4x1xf32>
    %102 = arith.mulf %91, %101 : vector<4x1xf32>
    %103 = arith.subf %84, %102 : vector<4x1xf32>
    %104 = vector.broadcast %101 : vector<4x1xf32> to vector<4x128xf32>
    %105 = arith.mulf %82, %104 : vector<4x128xf32>
    %106 = vector.broadcast %103 : vector<4x1xf32> to vector<4x128xf32>
    %107 = arith.addf %105, %106 : vector<4x128xf32>
    %108 = vector.extract_strided_slice %4 {offsets = [4, 0], sizes = [4, 128], strides = [1, 1]} : vector<12x128xf32> to vector<4x128xf32>
    %109 = arith.addf %107, %108 : vector<4x128xf32>
    %cst_34 = arith.constant 0.000000e+00 : f32
    %110 = vector.broadcast %cst_34 : f32 to vector<4x128xf32>
    %111 = arith.cmpf oge, %109, %110 : vector<4x128xf32>
    %cst_35 = arith.constant 1.000000e-01 : f32
    %112 = vector.broadcast %cst_35 : f32 to vector<4x128xf32>
    %113 = arith.mulf %112, %109 : vector<4x128xf32>
    %114 = arith.select %111, %109, %113 : vector<4x128xi1>, vector<4x128xf32>
    %c0_36 = arith.constant 0 : index
    %c0_37 = arith.constant 0 : index
    %115 = vector.load %arg9[%c0_36, %c0_37] : memref<4x128xf32, #tpu.memory_space<vmem>>, vector<4x128xf32>
    tpu.vector_store %arg9[%c0_36, %c0_37], %114 {strides = array<i32>} : memref<4x128xf32, #tpu.memory_space<vmem>>, vector<4x128xf32>,
    return
  }
}

</mosaic_0001>

<llo_original>
// kernel: tpu_custom_call.1
$region0: #{tpu_custom_call.1}
  #allocation0 [shape = 'u32[]', space=smem, size = 0x4, offset = 0x4, fixed_abs, tag = 'smem constant byte address 0x4 - core index']
  #allocation1 [shape = 'u32[72,128]{1,0:T(1,128)}', space=vmem, size = 0x9000, scoped, tag = 'internal scratch']
  #allocation2 [shape = 's32[1]{0:T(128)S(6)}', space=smem, size = 0x200, scoped, tag = 'scoped memory for tpu_custom_call.1']
  %s0 = inlined_call_operand.<no memory space> [shape: s32[1], index: 0, kind: input, shape index: {}]
  %s1 = inlined_call_operand.vmem [shape: f32[3,128], index: 1, kind: input, shape index: {}]
  %s2 = inlined_call_operand.hbm [shape: f32[12,128], index: 2, kind: input, shape index: {}]
  %s3 = inlined_call_operand.vmem [shape: f32[4,12], index: 3, kind: input, shape index: {}]
  %s4 = inlined_call_operand.vmem [shape: f32[4,1], index: 4, kind: input, shape index: {}]
  %s5 = inlined_call_operand.vmem [shape: f32[4,1], index: 5, kind: input, shape index: {}]
  %s6 = inlined_call_operand.vmem [shape: f32[4,12], index: 6, kind: input, shape index: {}]
  %s7 = inlined_call_operand.vmem [shape: f32[4,1], index: 7, kind: input, shape index: {}]
  %s8 = inlined_call_operand.vmem [shape: f32[4,1], index: 8, kind: input, shape index: {}]
  %s9 = inlined_call_operand.hbm [shape: f32[4,128], index: 9, kind: output, shape index: {}]
  %s10 = sld [smem:[#allocation0]]
  $region50: #{tpu_custom_call.1} parent=0
    _
  %s12 = ssub.s32 1, %s10
  %s13 = scalar_select 0, %s12, %s10
  %14 = sst [smem:[#allocation2]] %s0
  $region1: #{tpu_custom_call.1} parent=0
    #allocation3 [shape = 'u8[8192]{0}', space=vmem, size = 0x2000, scoped, tag = 'input window, operand 2, single buffered']
    #allocation4 [shape = 's32[1]{0}', space=sflag, size = 0x4, scoped, tag = 'scoped memory for tpu_custom_call.1']
    #allocation5 [shape = 's32[1]{0}', space=sflag, size = 0x4, scoped, tag = 'scoped memory for tpu_custom_call.1']
    #allocation6 [shape = 'u8[2048]{0}', space=vmem, size = 0x800, scoped, tag = 'output window, operand 0, single buffered']
    %15 = vsyncpa [#allocation4], 0
    %16 = vsyncpa [#allocation5], 0
    // Predicated region
    $region2: #{tpu_custom_call.1} parent=1 // pred_check
      _
    $region3: #{tpu_custom_call.1} parent=1 // pred_check_branch
      %18 = sbr.rel (0) target = $region5
    $region4: #{tpu_custom_call.1} parent=1 // pred_region
      _
    $region5: #{tpu_custom_call.1} parent=1 // pred_fallthru
      _
    // Predicated region
    $region6: #{tpu_custom_call.1} parent=1 // pred_check
      _
    $region7: #{tpu_custom_call.1} parent=1 // pred_check_branch
      %20 = sbr.rel (0) target = $region9
    $region8: #{tpu_custom_call.1} parent=1 // pred_region
      _
    $region9: #{tpu_custom_call.1} parent=1 // pred_fallthru
      _
    // Predicated region
    $region10: #{tpu_custom_call.1} parent=1 // pred_check
      _
    $region11: #{tpu_custom_call.1} parent=1 // pred_check_branch
      %22 = sbr.rel (0) target = $region13
    $region12: #{tpu_custom_call.1} parent=1 // pred_region
      %24 = vsyncadd [#allocation4], 0
      %s25 = sshll.u32 %s2, 4
      %s26 = int_to_ptr.hbm [resolvable:$true] %s25
      %s27 = sshll.u32 [#allocation3], 4
      %s28 = int_to_ptr.vmem [resolvable:$true] %s27
      %33 = dma.hbm_to_vmem [thread:$0]  %s26, 256, %s28, [#allocation4], 128, 128, 8
    $region13: #{tpu_custom_call.1} parent=1 // pred_fallthru
      _
    // Predicated region
    $region14: #{tpu_custom_call.1} parent=1 // pred_check
      _
    $region15: #{tpu_custom_call.1} parent=1 // pred_check_branch
      %35 = sbr.rel (0) target = $region17
    $region16: #{tpu_custom_call.1} parent=1 // pred_region
      _
    $region17: #{tpu_custom_call.1} parent=1 // pred_fallthru
      _
    // Predicated region
    $region18: #{tpu_custom_call.1} parent=1 // pred_check
      _
    $region19: #{tpu_custom_call.1} parent=1 // pred_check_branch
      %37 = sbr.rel (0) target = $region21
    $region20: #{tpu_custom_call.1} parent=1 // pred_region
      _
    $region21: #{tpu_custom_call.1} parent=1 // pred_fallthru
      _
    // Predicated region
    $region22: #{tpu_custom_call.1} parent=1 // pred_check
      _
    $region23: #{tpu_custom_call.1} parent=1 // pred_check_branch
      %39 = sbr.rel (0) target = $region25
    $region24: #{tpu_custom_call.1} parent=1 // pred_region
      _
    $region25: #{tpu_custom_call.1} parent=1 // pred_fallthru
      _
    // Predicated region
    $region26: #{tpu_custom_call.1} parent=1 // pred_check
      _
    $region27: #{tpu_custom_call.1} parent=1 // pred_check_branch
      %41 = sbr.rel (0) target = $region29
    $region28: #{tpu_custom_call.1} parent=1 // pred_region
      _
    $region29: #{tpu_custom_call.1} parent=1 // pred_fallthru
      _
    // Predicated region
    $region30: #{tpu_custom_call.1} parent=1 // pred_check
      _
    $region31: #{tpu_custom_call.1} parent=1 // pred_check_branch
      %43 = sbr.rel (0) target = $region33
    $region32: #{tpu_custom_call.1} parent=1 // pred_region
      _
    $region33: #{tpu_custom_call.1} parent=1 // pred_fallthru
      _
    // Predicated region
    $region34: #{tpu_custom_call.1} parent=1 // pred_check
      _
    $region35: #{tpu_custom_call.1} parent=1 // pred_check_branch
      %45 = sbr.rel (0) target = $region37
    $region36: #{tpu_custom_call.1} parent=1 // pred_region
      _
    $region37: #{tpu_custom_call.1} parent=1 // pred_fallthru
      _
    // Predicated region
    $region38: #{tpu_custom_call.1} parent=1 // pred_check
      _
    $region39: #{tpu_custom_call.1} parent=1 // pred_check_branch
      %47 = sbr.rel (0) target = $region41
    $region40: #{tpu_custom_call.1} parent=1 // pred_region
      %49 = dma.done [#allocation4], 256
    $region41: #{tpu_custom_call.1} parent=1 // pred_fallthru
      _
    %v50 = vld [vmem:[%s1] sm:$0x7]
    %v51 = vld [vmem:[#allocation3] sm:$0xff]
    %v52 = vld [vmem:[#allocation3 + $0x8] sm:$0xf]
    %v53 = vld [vmem:[%s3] sm:$0xf]
    %vm54 = vcmask 97280
    %v56 = vsel %vm54, %v53, 0
    %vm58 = vcmask 1043456
    %v60 = vsel %vm58, %v52, 0
    %62 = vmatpush.msra.mxu0 0.0
    %63 = vmatpush.msra.mxu0 0.0
    %64 = vmatpush.msra.mxu0 0.0
    %65 = vmatpush.msra.mxu0 0.0
    %66 = vmatpush.msra.mxu0 0.0
    %67 = vmatpush.msra.mxu0 0.0
    %68 = vmatpush.msra.mxu0 0.0
    %69 = vmatpush.msra.mxu0 0.0
    %70 = vmatpush.msra.mxu0 0.0
    %71 = vmatpush.msra.mxu0 0.0
    %72 = vmatpush.msra.mxu0 0.0
    %73 = vmatpush.msra.mxu0 0.0
    %74 = vmatpush.msra.mxu0 0.0
    %75 = vmatpush.msra.mxu0 0.0
    %76 = vmatpush.msra.mxu0 %v60
    %77 = vmatpush.msra.mxu0 %v51
    %78 = vmatmul.f32.gmra.mxu0 %v56
    %v79 = vpop.f32.mrf.mxu0
    %v80 = vadd.f32 0.0, %v79
    %81 = vdwg.mxu0
    %v82 = vld [vmem:[%s4] sm:$0xf]
    %v83 = vld [vmem:[%s5] sm:$0xf]
    %v84 = vsel %vm58, %v80, 0.0
    %85 = vadd.xlane.f32.xlu0 %v84
    %v86 = vpop.xlane.xlu0 %85
    %v87 = vmul.f32 %v80, %v80
    %v88 = vsel %vm58, %v87, 0.0
    %89 = vadd.xlane.f32.xlu0 %v88
    %v90 = vpop.xlane.xlu0 %89
    %v91 = vmul.f32 %v86, 0.03125
    %v92 = vmul.f32 %v90, 0.03125
    %v93 = vmul.f32 %v91, %v91
    %v94 = vsub.f32 %v92, %v93
    %v95 = vmax.f32 %v94, 0.0
    %v96 = vadd.f32 %v95, 1e-05
    %v97 = vrsqrt.pop %v96
    %v98 = vmul.f32 %v97, %v96
    %v99 = vmul.f32 %v98, %v97
    %v100 = vmul.f32 0.5, %v99
    %v101 = vsub.f32 1.5, %v100
    %v102 = vmul.f32 %v97, %v101
    %vm103 = vweird.f32 %v96
    %vm104 = vweird.f32 %v97
    %vm105 = vmor %vm103, %vm104
    %v106 = vsel %vm105, %v97, %v102
    %v107 = vmul.f32 %v82, %v106
    %v108 = vmul.f32 %v91, %v107
    %v109 = vsub.f32 %v83, %v108
    %111 = vset.pattern.permute.xlu0 0
    %112 = vperm.xlu0 %111, %v107
    %v113 = vpop.permute.xlu0 %112
    %v115 = vmul.f32 %v80, %v113
    %117 = vset.pattern.permute.xlu0 0
    %118 = vperm.xlu0 %117, %v109
    %v119 = vpop.permute.xlu0 %118
    %v121 = vadd.f32 %v115, %v119
    %vm122 = vcmp.ge.f32.partialorder %v121, 0.0
    %v123 = vmul.f32 %v121, 0.1
    %v124 = vsel %vm122, %v121, %v123
    %s125 = sld [smem:[#allocation2]]
    %v126 = vlaneseq
    %v127 = vshrl.u32 %v126, 7
    %v128 = vmul.u32 %v127, 128
    %v129 = vlaneseq
    %v130 = vand.u32 %v129, 127
    %v131 = vadd.s32 %v128, %v130
    %v132 = vmul.u32 %v131, 2654435769
    %v133 = vstv %s125
    %v134 = vadd.s32 %v132, %v133
    %v135 = vshrl.u32 %v134, 16
    %v136 = vxor.u32 %v134, %v135
    %v137 = vmul.u32 %v136, 2146121005
    %v138 = vshrl.u32 %v137, 15
    %v139 = vxor.u32 %v137, %v138
    %v140 = vmul.u32 %v139, 2221713035
    %v141 = vshrl.u32 %v140, 16
    %v142 = vxor.u32 %v140, %v141
    %v143 = vand.u32 %v142, 2147483647
    %v144 = vadd.s32 %v143, 2147483648
    %vm146 = vcmp.lt.s32.totalorder %v144, 3221225472
    %v147 = vsel %vm146, 1, 0
    %v148 = vcvt.s32.f32 %v147
    %v149 = vmul.f32 %v148, 2.0
    %v150 = vmul.f32 %v124, %v149
    %v151 = vperm.slane %v50, 0
    %v152 = vmul.f32 %v150, %v151
    %154 = vrot.lane.b32.xlu0 %v152, 1
    %v155 = vpop.permute.xlu0 %154
    %vm157 = vcmask 7168
    %v158 = vsel %vm157, 0.0, %v155
    %v159 = vperm.slane %v50, 1
    %v160 = vmul.f32 %v158, %v159
    %161 = vrot.lane.b32.xlu0 %v152, 127
    %v162 = vpop.permute.xlu0 %161
    %vm164 = vcmask 1039360
    %v165 = vsel %vm164, %v162, 0.0
    %v166 = vperm.slane %v50, 2
    %v167 = vmul.f32 %v165, %v166
    %v168 = vrot.slane %v152, 4
    %v170 = vsel %vm58, %v160, %v168
    %v171 = vld [vmem:[%s6] sm:$0xf]
    %v173 = vsel %vm54, %v171, 0
    %v176 = vsel %vm58, %v167, 0
    %178 = vmatpush.msra.mxu0 0.0
    %179 = vmatpush.msra.mxu0 0.0
    %180 = vmatpush.msra.mxu0 0.0
    %181 = vmatpush.msra.mxu0 0.0
    %182 = vmatpush.msra.mxu0 0.0
    %183 = vmatpush.msra.mxu0 0.0
    %184 = vmatpush.msra.mxu0 0.0
    %185 = vmatpush.msra.mxu0 0.0
    %186 = vmatpush.msra.mxu0 0.0
    %187 = vmatpush.msra.mxu0 0.0
    %188 = vmatpush.msra.mxu0 0.0
    %189 = vmatpush.msra.mxu0 0.0
    %190 = vmatpush.msra.mxu0 0.0
    %191 = vmatpush.msra.mxu0 0.0
    %192 = vmatpush.msra.mxu0 %v176
    %193 = vmatpush.msra.mxu0 %v170
    %194 = vmatmul.f32.gmra.mxu0 %v173
    %v195 = vpop.f32.mrf.mxu0
    %v196 = vadd.f32 0.0, %v195
    %197 = vdwg.mxu0
    %v198 = vld [vmem:[%s7] sm:$0xf]
    %v199 = vld [vmem:[%s8] sm:$0xf]
    %v200 = vsel %vm58, %v196, 0.0
    %201 = vadd.xlane.f32.xlu0 %v200
    %v202 = vpop.xlane.xlu0 %201
    %v203 = vmul.f32 %v196, %v196
    %v204 = vsel %vm58, %v203, 0.0
    %205 = vadd.xlane.f32.xlu0 %v204
    %v206 = vpop.xlane.xlu0 %205
    %v207 = vmul.f32 %v202, 0.03125
    %v208 = vmul.f32 %v206, 0.03125
    %v209 = vmul.f32 %v207, %v207
    %v210 = vsub.f32 %v208, %v209
    %v211 = vmax.f32 %v210, 0.0
    %v212 = vadd.f32 %v211, 1e-05
    %v213 = vrsqrt.pop %v212
    %v214 = vmul.f32 %v213, %v212
    %v215 = vmul.f32 %v214, %v213
    %v216 = vmul.f32 0.5, %v215
    %v217 = vsub.f32 1.5, %v216
    %v218 = vmul.f32 %v213, %v217
    %vm219 = vweird.f32 %v212
    %vm220 = vweird.f32 %v213
    %vm221 = vmor %vm219, %vm220
    %v222 = vsel %vm221, %v213, %v218
    %v223 = vmul.f32 %v198, %v222
    %v224 = vmul.f32 %v207, %v223
    %v225 = vsub.f32 %v199, %v224
    %227 = vset.pattern.permute.xlu0 0
    %228 = vperm.xlu0 %227, %v223
    %v229 = vpop.permute.xlu0 %228
    %v231 = vmul.f32 %v196, %v229
    %233 = vset.pattern.permute.xlu0 0
    %234 = vperm.xlu0 %233, %v225
    %v235 = vpop.permute.xlu0 %234
    %v237 = vadd.f32 %v231, %v235
    %v239 = vrot.slane %v51, 4
    %v241 = vadd.f32 %v237, %v239
    %vm242 = vcmp.ge.f32.partialorder %v241, 0.0
    %v243 = vmul.f32 %v241, 0.1
    %v244 = vsel %vm242, %v241, %v243
    %245 = vst [vmem:[#allocation6] sm:$0xf] %v244
    // Predicated region
    $region42: #{tpu_custom_call.1} parent=1 // pred_check
      _
    $region43: #{tpu_custom_call.1} parent=1 // pred_check_branch
      %247 = sbr.rel (0) target = $region45
    $region44: #{tpu_custom_call.1} parent=1 // pred_region
      %249 = vsyncadd [#allocation5], 0
      %s251 = sshll.u32 [#allocation6], 4
      %s252 = int_to_ptr.vmem [resolvable:$true] %s251
      %s253 = sshll.u32 %s9, 4
      %s254 = int_to_ptr.hbm [resolvable:$true] %s253
      %256 = dma.vmem_to_hbm [thread:$0]  %s252, 64, %s254, [#allocation5]
    $region45: #{tpu_custom_call.1} parent=1 // pred_fallthru
      _
    // Predicated region
    $region46: #{tpu_custom_call.1} parent=1 // pred_check
      _
    $region47: #{tpu_custom_call.1} parent=1 // pred_check_branch
      %258 = sbr.rel (0) target = $region49
    $region48: #{tpu_custom_call.1} parent=1 // pred_region
      %260 = dma.done [#allocation5], 64
    $region49: #{tpu_custom_call.1} parent=1 // pred_fallthru
      _
    %261 = vsyncpa [#allocation4], 1
    %262 = vsyncpa [#allocation5], 1

</llo_original>
